<compile_context>
chip_gen: v6e
topology: v6e:2x2x1
jax: 0.10.0
libtpu: 0.0.40
codegen_flags: <defaults>
</compile_context>

<pallas_src>
import functools

import jax
import jax.numpy as jnp
from jax import lax
from jax.experimental import pallas as pl
from jax.experimental.pallas import tpu as pltpu

_LANE = 128
_SUB = 8
_BN_EPS = 1e-5


def _round_up(n, m):
    return ((n + m - 1) // m) * m


def _pad2(a, rows, cols):
    return jnp.pad(a, ((0, rows - a.shape[0]), (0, cols - a.shape[1])))


def _vmem_capacity_bytes():
    try:
        return int(pltpu.get_tpu_info().vmem_capacity_bytes)
    except Exception:
        return 64 << 20  # conservative default (v7x per-TensorCore)


def _mlp_kernel(x_ref, w1_ref, bgb_ref, w2_ref, b2_ref, o_ref, *, eps, inv_batch):
    j = pl.program_id(0)

    # ---- fc1 tile + tanh ---------------------------------------------------
    # MXU matmul (bf16 or f32 operands), f32 accumulation; bias/tanh in f32.
    h = jnp.dot(x_ref[...], w1_ref[...], preferred_element_type=jnp.float32)
    bgb = bgb_ref[...]                      # (3, TH) packed: b1 / gamma / beta
    h = jnp.tanh(h + bgb[0:1, :])

    # ---- BatchNorm1d (training mode), tile-local per-feature stats ----------
    # Batch axis is whole in every tile -> stats are exact.
    # Single-pass E[h^2]-E[h]^2 is acceptable only because tanh bounds h to
    # [-1, 1]; var is clamped at 0.
    s = jnp.sum(h, axis=0, keepdims=True)
    sq = jnp.sum(h * h, axis=0, keepdims=True)
    mean = s * inv_batch
    var = jnp.maximum(sq * inv_batch - mean * mean, 0.0)
    scale = lax.rsqrt(var + eps) * bgb[1:2, :]
    h_bn = (h - mean) * scale + bgb[2:3, :]

    # ---- fc23: accumulate directly into the VMEM-resident f32 output --------
    contrib = jnp.dot(h_bn.astype(w2_ref.dtype), w2_ref[...],
                      preferred_element_type=jnp.float32)

    @pl.when(j == 0)
    def _():
        o_ref[...] = contrib + b2_ref[...]      # bias folded into the init

    @pl.when(j > 0)
    def _():
        o_ref[...] += contrib


def _auto_block_h(B, f_pad, n_hidden, o_pad, mm_item, vmem_budget):
    """Pick the hidden-tile width. Prefer a single grid step; otherwise the
    largest 256-multiple (v6e/v7x MXU width) whose footprint fits the budget."""
    h_full = _round_up(n_hidden, _LANE)
    resident = (_round_up(B, _SUB) * f_pad * mm_item     # x (constant index)
                + _SUB * o_pad * 4                        # b2 (constant index)
                + _round_up(B, _SUB) * o_pad * 4)         # resident f32 output

    def need(bh):
        streamed = 2 * (f_pad * bh * mm_item              # w1 (double buffered)
                        + _SUB * bh * 4                    # packed b1/gamma/beta
                        + bh * o_pad * mm_item)            # w2 (double buffered)
        return resident + streamed

    if need(h_full) * 1.3 <= vmem_budget:
        return h_full                  # grid=(1,): no pipeline / accumulator RMW
    for bh in (2048, 1024, 512, 256):
        if bh <= h_full and need(bh) * 1.3 <= vmem_budget:
            return bh
    return _LANE


@functools.partial(jax.jit, static_argnames=("matmul_dtype", "block_h"))
def mlp_forward(x, w1, b1, gamma, beta, w2, b2, *,
                matmul_dtype=jnp.bfloat16, block_h=None):
    """Forward pass matching MLP.forward (BatchNorm1d in training mode)."""
    B, n_feature = x.shape
    n_hidden, n_output = w2.shape
    mm_item = jnp.dtype(matmul_dtype).itemsize

    f_pad = _round_up(n_feature, _LANE)
    o_pad = _round_up(n_output, _LANE)

    vmem_cap = _vmem_capacity_bytes()
    vmem_budget = (vmem_cap * 5) // 8          # ~40 MiB on v7x, ~80 MiB on v5e/v6e

    if block_h is None:
        block_h = _auto_block_h(B, f_pad, n_hidden, o_pad, mm_item, vmem_budget)
    h_pad = _round_up(n_hidden, block_h)
    n_tiles = h_pad // block_h

    # 2-D rows for TPU-friendly broadcasting; BN / bias math kept in f32.
    b1 = jnp.reshape(b1, (1, -1)).astype(jnp.float32)
    gamma = jnp.reshape(gamma, (1, -1)).astype(jnp.float32)
    beta = jnp.reshape(beta, (1, -1)).astype(jnp.float32)
    b2 = jnp.reshape(b2, (1, -1)).astype(jnp.float32)

    # Zero-padding is inert: padded hidden columns give h == 0, BN maps them to
    # beta_pad == 0, and padded w2 rows / output columns are zero anyway.
    xp = _pad2(x, B, f_pad).astype(matmul_dtype)
    w1p = _pad2(w1, f_pad, h_pad).astype(matmul_dtype)
    w2p = _pad2(w2, h_pad, o_pad).astype(matmul_dtype)
    bgb = jnp.concatenate([_pad2(b1, 1, h_pad),
                           _pad2(gamma, 1, h_pad),
                           _pad2(beta, 1, h_pad)], axis=0)    # (3, h_pad) f32
    b2p = _pad2(b2, 1, o_pad)

    kernel = functools.partial(_mlp_kernel, eps=_BN_EPS, inv_batch=1.0 / B)

    grid_spec = pltpu.PrefetchScalarGridSpec(
        num_scalar_prefetch=0,
        grid=(n_tiles,),
        in_specs=[
            pl.BlockSpec((B, f_pad), lambda j: (0, 0)),         # x (VMEM-resident)
            pl.BlockSpec((f_pad, block_h), lambda j: (0, j)),   # w1 tile
            pl.BlockSpec((3, block_h), lambda j: (0, j)),       # b1/gamma/beta pack
            pl.BlockSpec((block_h, o_pad), lambda j: (j, 0)),   # w2 tile
            pl.BlockSpec((1, o_pad), lambda j: (0, 0)),         # b2 (resident)
        ],
        out_specs=pl.BlockSpec((B, o_pad), lambda j: (0, 0)),   # resident f32 acc
        scratch_shapes=[],
    )

    # VMEM budget: constant-index blocks counted once, streamed blocks twice
    # (double-buffered); headroom but never below the computed requirement.
    resident_bytes = (_round_up(B, _SUB) * f_pad * mm_item
                      + _SUB * o_pad * 4
                      + _round_up(B, _SUB) * o_pad * 4)
    streamed_bytes = 2 * (f_pad * block_h * mm_item
                          + _SUB * block_h * 4
                          + block_h * o_pad * mm_item)
    vmem_need = resident_bytes + streamed_bytes
    vmem_limit = max(int(vmem_need * 1.3) + (2 << 20), 8 << 20)
    vmem_limit = min(vmem_limit, vmem_budget)
    vmem_limit = int(max(vmem_limit, vmem_need + (1 << 20)))

    cost = pl.CostEstimate(
        flops=2 * B * f_pad * h_pad + 2 * B * h_pad * o_pad + 10 * B * h_pad,
        transcendentals=B * h_pad + h_pad,                     # tanh + rsqrt
        bytes_accessed=(B * f_pad * mm_item + f_pad * h_pad * mm_item
                        + h_pad * o_pad * mm_item + 3 * h_pad * 4
                        + o_pad * 4 + B * o_pad * 4),
    )

    out = pl.pallas_call(
        kernel,
        out_shape=jax.ShapeDtypeStruct((B, o_pad), jnp.float32),
        grid_spec=grid_spec,
        compiler_params=pltpu.CompilerParams(
            # hidden-tile axis is a reduction into the resident output
            dimension_semantics=("arbitrary",),
            vmem_limit_bytes=vmem_limit,
        ),
        cost_estimate=cost,
    )(xp, w1p, bgb, w2p, b2p)

    return out[:, :n_output]


def init_params(key, n_feature, n_hidden, n_output):
    """Deterministic init mimicking PyTorch Linear (uniform +/- 1/sqrt(fan_in)).
    Weights stored pre-transposed as [in_dim, out_dim]."""
    k1, k2, k3, k4 = jax.random.split(key, 4)
    bound1 = 1.0 / jnp.sqrt(n_feature)
    bound2 = 1.0 / jnp.sqrt(n_hidden)
    w1 = jax.random.uniform(k1, (n_feature, n_hidden), jnp.float32, -bound1, bound1)
    b1 = jax.random.uniform(k2, (n_hidden,), jnp.float32, -bound1, bound1)
    w2 = jax.random.uniform(k3, (n_hidden, n_output), jnp.float32, -bound2, bound2)
    b2 = jax.random.uniform(k4, (n_output,), jnp.float32, -bound2, bound2)
    gamma = jnp.ones((n_hidden,), jnp.float32)   # BatchNorm1d affine init
    beta = jnp.zeros((n_hidden,), jnp.float32)
    return w1, b1, gamma, beta, w2, b2


def mlp_reference(x, w1, b1, gamma, beta, w2, b2, matmul_dtype=jnp.float32):
    """Pure-JAX reference with the same operand-dtype policy as the kernel."""
    dt = matmul_dtype
    h = jnp.dot(x.astype(dt), w1.astype(dt),
                preferred_element_type=jnp.float32) + b1
    h = jnp.tanh(h)
    mean = jnp.mean(h, axis=0, keepdims=True)
    var = jnp.mean(jnp.square(h - mean), axis=0, keepdims=True)
    h_bn = (h - mean) * lax.rsqrt(var + _BN_EPS) * gamma + beta
    return jnp.dot(h_bn.astype(dt), w2.astype(dt),
                   preferred_element_type=jnp.float32) + b2


if __name__ == "__main__":
    key = jax.random.PRNGKey(0)

    cases = [
        # (B, n_feature, n_hidden, n_output, explicit block_h or None)
        (8, 16, 32, 8, None),       # original toy sizes: single grid step
        (24, 160, 300, 10, None),   # unaligned dims, auto block_h -> one tile
        (24, 160, 300, 10, 128),    # forced 3 hidden tiles -> accumulation path
    ]

    for idx, (B, nf, nh, no, bh) in enumerate(cases):
        key, kx, kp = jax.random.split(key, 3)
        x = jax.random.normal(kx, (B, nf), jnp.float32)
        params = init_params(kp, nf, nh, no)

        # f32 path
        out = jax.block_until_ready(
            mlp_forward(x, *params, matmul_dtype=jnp.float32, block_h=bh))
        ref = mlp_reference(x, *params, matmul_dtype=jnp.float32)
        assert out.shape == (B, no)
        assert jnp.allclose(out, ref, atol=1e-4, rtol=1e-4), (
            f"f32 mismatch (case {idx}): max err "
            f"{float(jnp.max(jnp.abs(out - ref)))}")

        # default bf16 matmul-operand path; BN/tanh remain f32 in-kernel.
        out_bf = jax.block_until_ready(mlp_forward(x, *params, block_h=bh))
        ref_bf = mlp_reference(x, *params, matmul_dtype=jnp.bfloat16)
        assert jnp.allclose(out_bf, ref_bf, atol=1e-2, rtol=1e-2), (
            f"bf16 mismatch (case {idx}): max err "
            f"{float(jnp.max(jnp.abs(out_bf - ref_bf)))}")

    print("KERNEL_OK")
</pallas_src>

<mosaic_0001>
module attributes {stable_mosaic.version = 11 : i64} {
  func.func @_mlp_kernel(%arg0: i32, %arg1: memref<8x128xf32, #tpu.memory_space<vmem>>, %arg2: memref<128x128xf32, #tpu.memory_space<vmem>>, %arg3: memref<3x128xf32, #tpu.memory_space<vmem>>, %arg4: memref<128x128xf32, #tpu.memory_space<vmem>>, %arg5: memref<1x128xf32, #tpu.memory_space<vmem>>, %arg6: memref<8x128xf32, #tpu.memory_space<vmem>>) attributes {dimension_semantics = [#tpu.dimension_semantics<arbitrary>], iteration_bounds = array<i64: 1>, scalar_prefetch = 0 : i64, scratch_operands = 0 : i64, tpu.core_type = #tpu.core_type<tc>, window_params = [{pipeline_mode = #tpu.pipeline_mode<synchronous>, transform_indices = @transform_0, window_bounds = array<i64: 8, 128>}, {transform_indices = @transform_1, window_bounds = array<i64: 128, 128>}, {transform_indices = @transform_2, window_bounds = array<i64: 3, 128>}, {transform_indices = @transform_3, window_bounds = array<i64: 128, 128>}, {pipeline_mode = #tpu.pipeline_mode<synchronous>, transform_indices = @transform_4, window_bounds = array<i64: 1, 128>}, {pipeline_mode = #tpu.pipeline_mode<synchronous>, transform_indices = @transform_5, window_bounds = array<i64: 8, 128>}]} {
    %c0 = arith.constant 0 : index
    %c0_0 = arith.constant 0 : index
    %0 = vector.load %arg1[%c0, %c0_0] : memref<8x128xf32, #tpu.memory_space<vmem>>, vector<8x128xf32>
    %c0_1 = arith.constant 0 : index
    %c0_2 = arith.constant 0 : index
    %1 = vector.load %arg2[%c0_1, %c0_2] : memref<128x128xf32, #tpu.memory_space<vmem>>, vector<128x128xf32>
    %cst = arith.constant dense<0.000000e+00> : vector<8x128xf32>
    %2 = tpu.matmul %0, %1, %cst {dimension_numbers = #tpu.dot_dimension_numbers<[1], [0], [0], [1], [0, 0, 1, 1], [], []>} : vector<8x128xf32>, vector<128x128xf32>, vector<8x128xf32> -> vector<8x128xf32>
    %c0_3 = arith.constant 0 : index
    %c0_4 = arith.constant 0 : index
    %3 = vector.load %arg3[%c0_3, %c0_4] : memref<3x128xf32, #tpu.memory_space<vmem>>, vector<3x128xf32>
    %4 = vector.extract_strided_slice %3 {offsets = [0, 0], sizes = [1, 128], strides = [1, 1]} : vector<3x128xf32> to vector<1x128xf32>
    %5 = vector.broadcast %4 : vector<1x128xf32> to vector<8x128xf32>
    %6 = arith.addf %2, %5 : vector<8x128xf32>
    %7 = math.tanh %6 : vector<8x128xf32>
    %cst_5 = arith.constant dense<0.000000e+00> : vector<128xf32>
    %8 = vector.multi_reduction <add>, %7, %cst_5 [0] : vector<8x128xf32> to vector<128xf32>
    %9 = vector.shape_cast %8 : vector<128xf32> to vector<1x128xf32>
    %10 = arith.mulf %7, %7 : vector<8x128xf32>
    %cst_6 = arith.constant dense<0.000000e+00> : vector<128xf32>
    %11 = vector.multi_reduction <add>, %10, %cst_6 [0] : vector<8x128xf32> to vector<128xf32>
    %12 = vector.shape_cast %11 : vector<128xf32> to vector<1x128xf32>
    %cst_7 = arith.constant 1.250000e-01 : f32
    %13 = vector.broadcast %cst_7 : f32 to vector<1x128xf32>
    %14 = arith.mulf %9, %13 : vector<1x128xf32>
    %cst_8 = arith.constant 1.250000e-01 : f32
    %15 = vector.broadcast %cst_8 : f32 to vector<1x128xf32>
    %16 = arith.mulf %12, %15 : vector<1x128xf32>
    %17 = arith.mulf %14, %14 : vector<1x128xf32>
    %18 = arith.subf %16, %17 : vector<1x128xf32>
    %cst_9 = arith.constant 0.000000e+00 : f32
    %19 = vector.broadcast %cst_9 : f32 to vector<1x128xf32>
    %20 = arith.maximumf %18, %19 : vector<1x128xf32>
    %cst_10 = arith.constant 9.99999974E-6 : f32
    %21 = vector.broadcast %cst_10 : f32 to vector<1x128xf32>
    %22 = arith.addf %20, %21 : vector<1x128xf32>
    %23 = math.rsqrt %22 : vector<1x128xf32>
    %24 = vector.extract_strided_slice %3 {offsets = [1, 0], sizes = [1, 128], strides = [1, 1]} : vector<3x128xf32> to vector<1x128xf32>
    %25 = arith.mulf %23, %24 : vector<1x128xf32>
    %26 = vector.broadcast %14 : vector<1x128xf32> to vector<8x128xf32>
    %27 = arith.subf %7, %26 : vector<8x128xf32>
    %28 = vector.broadcast %25 : vector<1x128xf32> to vector<8x128xf32>
    %29 = arith.mulf %27, %28 : vector<8x128xf32>
    %30 = vector.extract_strided_slice %3 {offsets = [2, 0], sizes = [1, 128], strides = [1, 1]} : vector<3x128xf32> to vector<1x128xf32>
    %31 = vector.broadcast %30 : vector<1x128xf32> to vector<8x128xf32>
    %32 = arith.addf %29, %31 : vector<8x128xf32>
    %c0_11 = arith.constant 0 : index
    %c0_12 = arith.constant 0 : index
    %33 = vector.load %arg4[%c0_11, %c0_12] : memref<128x128xf32, #tpu.memory_space<vmem>>, vector<128x128xf32>
    %cst_13 = arith.constant dense<0.000000e+00> : vector<8x128xf32>
    %34 = tpu.matmul %32, %33, %cst_13 {dimension_numbers = #tpu.dot_dimension_numbers<[1], [0], [0], [1], [0, 0, 1, 1], [], []>} : vector<8x128xf32>, vector<128x128xf32>, vector<8x128xf32> -> vector<8x128xf32>
    %c0_i32 = arith.constant 0 : i32
    %35 = arith.cmpi eq, %arg0, %c0_i32 : i32
    %36 = arith.extui %35 : i1 to i32
    %c0_i32_14 = arith.constant 0 : i32
    %37 = arith.cmpi ne, %36, %c0_i32_14 : i32
    scf.if %37 {
      %c0_17 = arith.constant 0 : index
      %c0_18 = arith.constant 0 : index
      %41 = vector.load %arg5[%c0_17, %c0_18] : memref<1x128xf32, #tpu.memory_space<vmem>>, vector<1x128xf32>
      %42 = vector.broadcast %41 : vector<1x128xf32> to vector<8x128xf32>
      %43 = arith.addf %34, %42 : vector<8x128xf32>
      %c0_19 = arith.constant 0 : index
      %c0_20 = arith.constant 0 : index
      %44 = vector.load %arg6[%c0_19, %c0_20] : memref<8x128xf32, #tpu.memory_space<vmem>>, vector<8x128xf32>
      tpu.vector_store %arg6[%c0_19, %c0_20], %43 {strides = array<i32>} : memref<8x128xf32, #tpu.memory_space<vmem>>, vector<8x128xf32>,
    } else {
    }
    %c0_i32_15 = arith.constant 0 : i32
    %38 = arith.cmpi sgt, %arg0, %c0_i32_15 : i32
    %39 = arith.extui %38 : i1 to i32
    %c0_i32_16 = arith.constant 0 : i32
    %40 = arith.cmpi ne, %39, %c0_i32_16 : i32
    scf.if %40 {
      %c0_17 = arith.constant 0 : index
      %c0_18 = arith.constant 0 : index
      %41 = vector.load %arg6[%c0_17, %c0_18] : memref<8x128xf32, #tpu.memory_space<vmem>>, vector<8x128xf32>
      %42 = arith.addf %41, %34 : vector<8x128xf32>
      %c0_19 = arith.constant 0 : index
      %c0_20 = arith.constant 0 : index
      %43 = vector.load %arg6[%c0_19, %c0_20] : memref<8x128xf32, #tpu.memory_space<vmem>>, vector<8x128xf32>
      tpu.vector_store %arg6[%c0_19, %c0_20], %42 {strides = array<i32>} : memref<8x128xf32, #tpu.memory_space<vmem>>, vector<8x128xf32>,
    } else {
    }
    return
  }
  func.func @transform_0(%arg0: i32) -> (i32, i32) {
    %c0_i32 = arith.constant 0 : i32
    %c0_i32_0 = arith.constant 0 : i32
    %c0_i32_1 = arith.constant 0 : i32
    return %c0_i32, %c0_i32_0 : i32, i32
  }
  func.func @transform_1(%arg0: i32) -> (i32, i32) {
    %c0_i32 = arith.constant 0 : i32
    %c0_i32_0 = arith.constant 0 : i32
    return %c0_i32, %arg0 : i32, i32
  }
  func.func @transform_2(%arg0: i32) -> (i32, i32) {
    %c0_i32 = arith.constant 0 : i32
    %c0_i32_0 = arith.constant 0 : i32
    return %c0_i32, %arg0 : i32, i32
  }
  func.func @transform_3(%arg0: i32) -> (i32, i32) {
    %c0_i32 = arith.constant 0 : i32
    %c0_i32_0 = arith.constant 0 : i32
    return %arg0, %c0_i32 : i32, i32
  }
  func.func @transform_4(%arg0: i32) -> (i32, i32) {
    %c0_i32 = arith.constant 0 : i32
    %c0_i32_0 = arith.constant 0 : i32
    %c0_i32_1 = arith.constant 0 : i32
    return %c0_i32, %c0_i32_0 : i32, i32
  }
  func.func @transform_5(%arg0: i32) -> (i32, i32) {
    %c0_i32 = arith.constant 0 : i32
    %c0_i32_0 = arith.constant 0 : i32
    %c0_i32_1 = arith.constant 0 : i32
    return %c0_i32, %c0_i32_0 : i32, i32
  }
}

</mosaic_0001>

<llo_original>
// kernel: mlp_forward.1
$region0: #{mlp_forward.1}
  #allocation0 [shape = 'u32[]', space=smem, size = 0x4, offset = 0x4, fixed_abs, tag = 'smem constant byte address 0x4 - core index']
  #allocation1 [shape = 'u32[144,128]{1,0:T(1,128)}', space=vmem, size = 0x12000, scoped, tag = 'internal scratch']
  %s0 = inlined_call_operand.vmem [shape: f32[8,128], index: 0, kind: input, shape index: {}]
  %s1 = inlined_call_operand.vmem [shape: f32[128,128], index: 1, kind: input, shape index: {}]
  %s2 = inlined_call_operand.vmem [shape: f32[3,128], index: 2, kind: input, shape index: {}]
  %s3 = inlined_call_operand.vmem [shape: f32[128,128], index: 3, kind: input, shape index: {}]
  %s4 = inlined_call_operand.vmem [shape: f32[1,128], index: 4, kind: input, shape index: {}]
  %s5 = inlined_call_operand.hbm [shape: f32[8,128], index: 5, kind: output, shape index: {}]
  %s6 = sld [smem:[#allocation0]]
  $region38: #{mlp_forward.1} parent=0
    _
  %s8 = ssub.s32 1, %s6
  %s9 = scalar_select 0, %s8, %s6
  $region1: #{mlp_forward.1} parent=0
    #allocation2 [shape = 'u8[4096]{0}', space=vmem, size = 0x1000, scoped, tag = 'output window, operand 0, single buffered']
    #allocation3 [shape = 's32[1]{0}', space=sflag, size = 0x4, scoped, tag = 'scoped memory for mlp_forward.1']
    %10 = vsyncpa [#allocation3], 0
    // Predicated region
    $region2: #{mlp_forward.1} parent=1 // pred_check
      _
    $region3: #{mlp_forward.1} parent=1 // pred_check_branch
      %12 = sbr.rel (0) target = $region5
    $region4: #{mlp_forward.1} parent=1 // pred_region
      _
    $region5: #{mlp_forward.1} parent=1 // pred_fallthru
      _
    // Predicated region
    $region6: #{mlp_forward.1} parent=1 // pred_check
      _
    $region7: #{mlp_forward.1} parent=1 // pred_check_branch
      %14 = sbr.rel (0) target = $region9
    $region8: #{mlp_forward.1} parent=1 // pred_region
      _
    $region9: #{mlp_forward.1} parent=1 // pred_fallthru
      _
    // Predicated region
    $region10: #{mlp_forward.1} parent=1 // pred_check
      _
    $region11: #{mlp_forward.1} parent=1 // pred_check_branch
      %16 = sbr.rel (0) target = $region13
    $region12: #{mlp_forward.1} parent=1 // pred_region
      _
    $region13: #{mlp_forward.1} parent=1 // pred_fallthru
      _
    // Predicated region
    $region14: #{mlp_forward.1} parent=1 // pred_check
      _
    $region15: #{mlp_forward.1} parent=1 // pred_check_branch
      %18 = sbr.rel (0) target = $region17
    $region16: #{mlp_forward.1} parent=1 // pred_region
      _
    $region17: #{mlp_forward.1} parent=1 // pred_fallthru
      _
    // Predicated region
    $region18: #{mlp_forward.1} parent=1 // pred_check
      _
    $region19: #{mlp_forward.1} parent=1 // pred_check_branch
      %20 = sbr.rel (0) target = $region21
    $region20: #{mlp_forward.1} parent=1 // pred_region
      _
    $region21: #{mlp_forward.1} parent=1 // pred_fallthru
      _
    %v21 = vld [vmem:[%s0] sm:$0xff]
    %v22 = vld [vmem:[%s1] sm:$0xff]
    %v23 = vld [vmem:[%s1 + $0x8] sm:$0xff]
    %v24 = vld [vmem:[%s1 + $0x10] sm:$0xff]
    %v25 = vld [vmem:[%s1 + $0x18] sm:$0xff]
    %v26 = vld [vmem:[%s1 + $0x20] sm:$0xff]
    %v27 = vld [vmem:[%s1 + $0x28] sm:$0xff]
    %v28 = vld [vmem:[%s1 + $0x30] sm:$0xff]
    %v29 = vld [vmem:[%s1 + $0x38] sm:$0xff]
    %v30 = vld [vmem:[%s1 + $0x40] sm:$0xff]
    %v31 = vld [vmem:[%s1 + $0x48] sm:$0xff]
    %v32 = vld [vmem:[%s1 + $0x50] sm:$0xff]
    %v33 = vld [vmem:[%s1 + $0x58] sm:$0xff]
    %v34 = vld [vmem:[%s1 + $0x60] sm:$0xff]
    %v35 = vld [vmem:[%s1 + $0x68] sm:$0xff]
    %v36 = vld [vmem:[%s1 + $0x70] sm:$0xff]
    %v37 = vld [vmem:[%s1 + $0x78] sm:$0xff]
    %v38 = vld [vmem:[%s2] sm:$0x7]
    %v39 = vlaneseq
    %v40 = vshrl.u32 %v39, 7
    %v41 = vsub.s32 0, %v40
    %v42 = vrot.slane %v38, %v41
    %43 = vmatprep.subr.mxu0 0.0
    %44 = vmatpush1.msra.mxu0 %v37
    %45 = vmatprep.subr.mxu0 0.0
    %46 = vmatpush1.msra.mxu0 %v36
    %47 = vmatprep.subr.mxu0 0.0
    %48 = vmatpush1.msra.mxu0 %v35
    %49 = vmatprep.subr.mxu0 0.0
    %50 = vmatpush1.msra.mxu0 %v34
    %51 = vmatprep.subr.mxu0 0.0
    %52 = vmatpush1.msra.mxu0 %v33
    %53 = vmatprep.subr.mxu0 0.0
    %54 = vmatpush1.msra.mxu0 %v32
    %55 = vmatprep.subr.mxu0 0.0
    %56 = vmatpush1.msra.mxu0 %v31
    %57 = vmatprep.subr.mxu0 0.0
    %58 = vmatpush1.msra.mxu0 %v30
    %59 = vmatprep.subr.mxu0 0.0
    %60 = vmatpush1.msra.mxu0 %v29
    %61 = vmatprep.subr.mxu0 0.0
    %62 = vmatpush1.msra.mxu0 %v28
    %63 = vmatprep.subr.mxu0 0.0
    %64 = vmatpush1.msra.mxu0 %v27
    %65 = vmatprep.subr.mxu0 0.0
    %66 = vmatpush1.msra.mxu0 %v26
    %67 = vmatprep.subr.mxu0 0.0
    %68 = vmatpush1.msra.mxu0 %v25
    %69 = vmatprep.subr.mxu0 0.0
    %70 = vmatpush1.msra.mxu0 %v24
    %71 = vmatprep.subr.mxu0 0.0
    %72 = vmatpush1.msra.mxu0 %v23
    %73 = vmatprep.subr.mxu0 0.0
    %74 = vmatpush1.msra.mxu0 %v22
    %75 = vmatprep.subr.mxu0 0.0
    %76 = vmatpush2.msra.mxu0 0.0
    %77 = vmatprep.subr.mxu0 0.0
    %78 = vmatpush2.msra.mxu0 0.0
    %79 = vmatprep.subr.mxu0 0.0
    %80 = vmatpush2.msra.mxu0 0.0
    %81 = vmatprep.subr.mxu0 0.0
    %82 = vmatpush2.msra.mxu0 0.0
    %83 = vmatprep.subr.mxu0 0.0
    %84 = vmatpush2.msra.mxu0 0.0
    %85 = vmatprep.subr.mxu0 0.0
    %86 = vmatpush2.msra.mxu0 0.0
    %87 = vmatprep.subr.mxu0 0.0
    %88 = vmatpush2.msra.mxu0 0.0
    %89 = vmatprep.subr.mxu0 0.0
    %90 = vmatpush2.msra.mxu0 0.0
    %91 = vmatprep.subr.mxu0 0.0
    %92 = vmatpush2.msra.mxu0 0.0
    %93 = vmatprep.subr.mxu0 0.0
    %94 = vmatpush2.msra.mxu0 0.0
    %95 = vmatprep.subr.mxu0 0.0
    %96 = vmatpush2.msra.mxu0 0.0
    %97 = vmatprep.subr.mxu0 0.0
    %98 = vmatpush2.msra.mxu0 0.0
    %99 = vmatprep.subr.mxu0 0.0
    %100 = vmatpush2.msra.mxu0 0.0
    %101 = vmatprep.subr.mxu0 0.0
    %102 = vmatpush2.msra.mxu0 0.0
    %103 = vmatprep.subr.mxu0 0.0
    %104 = vmatpush2.msra.mxu0 0.0
    %105 = vmatprep.subr.mxu0 0.0
    %106 = vmatpush2.msra.mxu0 0.0
    %107 = vmatprep.mubr.f32.mxu0 0.0
    %108 = vmatmul.mubr.f32.gmra.mxu0 %v21
    %v109 = vpop.f32.mrf.mxu0
    %v110 = vadd.f32 %v42, %v109
    %v111 = vpop.f32.mrf.mxu0
    %112 = vdwg.mxu0
    %v113 = vtanh.pop %v110
    %v114 = vrot.slane %v113, 4
    %v115 = vadd.f32 %v113, %v114
    %v116 = vrot.slane %v115, 2
    %v117 = vadd.f32 %v115, %v116
    %v118 = vrot.slane %v117, 1
    %v119 = vadd.f32 %v117, %v118
    %v120 = vmul.f32 %v113, %v113
    %v121 = vrot.slane %v120, 4
    %v122 = vadd.f32 %v120, %v121
    %v123 = vrot.slane %v122, 2
    %v124 = vadd.f32 %v122, %v123
    %v125 = vrot.slane %v124, 1
    %v126 = vadd.f32 %v124, %v125
    %v127 = vmul.f32 %v119, 0.125
    %v128 = vmul.f32 %v126, 0.125
    %v129 = vmul.f32 %v127, %v127
    %v130 = vsub.f32 %v128, %v129
    %v131 = vmax.f32 %v130, 0.0
    %v132 = vadd.f32 %v131, 1e-05
    %v133 = vrsqrt.pop %v132
    %v134 = vmul.f32 %v133, %v38
    %v135 = vsub.f32 %v113, %v127
    %v136 = vlaneseq
    %v137 = vshrl.u32 %v136, 7
    %v138 = vsub.s32 1, %v137
    %v139 = vrot.slane %v134, %v138
    %v140 = vmul.f32 %v135, %v139
    %v141 = vlaneseq
    %v142 = vshrl.u32 %v141, 7
    %v143 = vsub.s32 2, %v142
    %v144 = vrot.slane %v38, %v143
    %v145 = vadd.f32 %v140, %v144
    %v146 = vld [vmem:[%s3] sm:$0xff]
    %v147 = vld [vmem:[%s3 + $0x8] sm:$0xff]
    %v148 = vld [vmem:[%s3 + $0x10] sm:$0xff]
    %v149 = vld [vmem:[%s3 + $0x18] sm:$0xff]
    %v150 = vld [vmem:[%s3 + $0x20] sm:$0xff]
    %v151 = vld [vmem:[%s3 + $0x28] sm:$0xff]
    %v152 = vld [vmem:[%s3 + $0x30] sm:$0xff]
    %v153 = vld [vmem:[%s3 + $0x38] sm:$0xff]
    %v154 = vld [vmem:[%s3 + $0x40] sm:$0xff]
    %v155 = vld [vmem:[%s3 + $0x48] sm:$0xff]
    %v156 = vld [vmem:[%s3 + $0x50] sm:$0xff]
    %v157 = vld [vmem:[%s3 + $0x58] sm:$0xff]
    %v158 = vld [vmem:[%s3 + $0x60] sm:$0xff]
    %v159 = vld [vmem:[%s3 + $0x68] sm:$0xff]
    %v160 = vld [vmem:[%s3 + $0x70] sm:$0xff]
    %v161 = vld [vmem:[%s3 + $0x78] sm:$0xff]
    %162 = vmatprep.subr.mxu0 0.0
    %163 = vmatpush1.msra.mxu0 %v161
    %164 = vmatprep.subr.mxu0 0.0
    %165 = vmatpush1.msra.mxu0 %v160
    %166 = vmatprep.subr.mxu0 0.0
    %167 = vmatpush1.msra.mxu0 %v159
    %168 = vmatprep.subr.mxu0 0.0
    %169 = vmatpush1.msra.mxu0 %v158
    %170 = vmatprep.subr.mxu0 0.0
    %171 = vmatpush1.msra.mxu0 %v157
    %172 = vmatprep.subr.mxu0 0.0
    %173 = vmatpush1.msra.mxu0 %v156
    %174 = vmatprep.subr.mxu0 0.0
    %175 = vmatpush1.msra.mxu0 %v155
    %176 = vmatprep.subr.mxu0 0.0
    %177 = vmatpush1.msra.mxu0 %v154
    %178 = vmatprep.subr.mxu0 0.0
    %179 = vmatpush1.msra.mxu0 %v153
    %180 = vmatprep.subr.mxu0 0.0
    %181 = vmatpush1.msra.mxu0 %v152
    %182 = vmatprep.subr.mxu0 0.0
    %183 = vmatpush1.msra.mxu0 %v151
    %184 = vmatprep.subr.mxu0 0.0
    %185 = vmatpush1.msra.mxu0 %v150
    %186 = vmatprep.subr.mxu0 0.0
    %187 = vmatpush1.msra.mxu0 %v149
    %188 = vmatprep.subr.mxu0 0.0
    %189 = vmatpush1.msra.mxu0 %v148
    %190 = vmatprep.subr.mxu0 0.0
    %191 = vmatpush1.msra.mxu0 %v147
    %192 = vmatprep.subr.mxu0 0.0
    %193 = vmatpush1.msra.mxu0 %v146
    %194 = vmatprep.subr.mxu0 0.0
    %195 = vmatpush2.msra.mxu0 0.0
    %196 = vmatprep.subr.mxu0 0.0
    %197 = vmatpush2.msra.mxu0 0.0
    %198 = vmatprep.subr.mxu0 0.0
    %199 = vmatpush2.msra.mxu0 0.0
    %200 = vmatprep.subr.mxu0 0.0
    %201 = vmatpush2.msra.mxu0 0.0
    %202 = vmatprep.subr.mxu0 0.0
    %203 = vmatpush2.msra.mxu0 0.0
    %204 = vmatprep.subr.mxu0 0.0
    %205 = vmatpush2.msra.mxu0 0.0
    %206 = vmatprep.subr.mxu0 0.0
    %207 = vmatpush2.msra.mxu0 0.0
    %208 = vmatprep.subr.mxu0 0.0
    %209 = vmatpush2.msra.mxu0 0.0
    %210 = vmatprep.subr.mxu0 0.0
    %211 = vmatpush2.msra.mxu0 0.0
    %212 = vmatprep.subr.mxu0 0.0
    %213 = vmatpush2.msra.mxu0 0.0
    %214 = vmatprep.subr.mxu0 0.0
    %215 = vmatpush2.msra.mxu0 0.0
    %216 = vmatprep.subr.mxu0 0.0
    %217 = vmatpush2.msra.mxu0 0.0
    %218 = vmatprep.subr.mxu0 0.0
    %219 = vmatpush2.msra.mxu0 0.0
    %220 = vmatprep.subr.mxu0 0.0
    %221 = vmatpush2.msra.mxu0 0.0
    %222 = vmatprep.subr.mxu0 0.0
    %223 = vmatpush2.msra.mxu0 0.0
    %224 = vmatprep.subr.mxu0 0.0
    %225 = vmatpush2.msra.mxu0 0.0
    %226 = vmatprep.mubr.f32.mxu0 0.0
    %227 = vmatmul.mubr.f32.gmra.mxu0 %v145
    %v228 = vpop.f32.mrf.mxu0
    %v229 = vadd.f32 0.0, %v228
    %v230 = vpop.f32.mrf.mxu0
    %231 = vdwg.mxu0
    %p232 = scmp.eq.s32.totalorder 0, 0
    // Predicated region
    $region22: #{mlp_forward.1} parent=1 // pred_check
      %p233 = pneg %p232
    $region23: #{mlp_forward.1} parent=1 // pred_check_branch
      %235 = sbr.rel (%p233) target = $region25
    $region24: #{mlp_forward.1} parent=1 // pred_region
      %v236 = vld [vmem:[%s4] sm:$0x1]
      %v238 = vlaneseq
      %v239 = vshrl.u32 %v238, 7
      %v240 = vsub.s32 0, %v239
      %v241 = vrot.slane %v236, %v240
      %v243 = vadd.f32 %v229, %v241
      %244 = vst [vmem:[#allocation2] sm:$0xff] %v243
    $region25: #{mlp_forward.1} parent=1 // pred_fallthru
      _
    %p245 = scmp.gt.s32.totalorder 0, 0
    // Predicated region
    $region26: #{mlp_forward.1} parent=1 // pred_check
      %p246 = pneg %p245
    $region27: #{mlp_forward.1} parent=1 // pred_check_branch
      %248 = sbr.rel (%p246) target = $region29
    $region28: #{mlp_forward.1} parent=1 // pred_region
      %v249 = vld [vmem:[#allocation2] sm:$0xff]
      %v250 = vadd.f32 %v249, %v229
      %251 = vst [vmem:[#allocation2] sm:$0xff] %v250
    $region29: #{mlp_forward.1} parent=1 // pred_fallthru
      _
    // Predicated region
    $region30: #{mlp_forward.1} parent=1 // pred_check
      _
    $region31: #{mlp_forward.1} parent=1 // pred_check_branch
      %253 = sbr.rel (0) target = $region33
    $region32: #{mlp_forward.1} parent=1 // pred_region
      %s255 = ssub.s32 128, 128
      %256 = vsyncadd [#allocation3], %s255
      %s258 = sshll.u32 [#allocation2], 4
      %s259 = int_to_ptr.vmem [resolvable:$true] %s258
      %261 = dma.vmem_to_hbm [thread:$0]  %s259, 128, %s5, [#allocation3]
    $region33: #{mlp_forward.1} parent=1 // pred_fallthru
      _
    // Predicated region
    $region34: #{mlp_forward.1} parent=1 // pred_check
      _
    $region35: #{mlp_forward.1} parent=1 // pred_check_branch
      %263 = sbr.rel (0) target = $region37
    $region36: #{mlp_forward.1} parent=1 // pred_region
      %264 = dma.done [#allocation3], 128
    $region37: #{mlp_forward.1} parent=1 // pred_fallthru
      _
    %265 = vsyncpa [#allocation3], 1

</llo_original>
